<compile_context>
chip_gen: v7x
topology: tpu7x:2x2x1
jax: 0.10.0
libtpu: 0.0.40
codegen_flags: <defaults>
</compile_context>

<pallas_src>
import functools

import jax
import jax.numpy as jnp
from jax.experimental import pallas as pl
from jax.experimental.pallas import tpu as pltpu


def _round_up(x, m):
    return ((x + m - 1) // m) * m


def shared_critic_kernel(s_ref, a_ref, w1s_ref, w1a_ref, b1_ref,
                         w2_ref, b2_ref, w3t_ref, b3t_ref, ot_ref):
    """One batch tile of the fused SharedCritic forward.

    s_ref   : [TB, S]   f32   raw global_state tile
    a_ref   : [TB, A]   f32   raw global_action tile
    w1s_ref : [S,  H]   bf16  first-layer weights (state rows)
    w1a_ref : [A,  H]   bf16  first-layer weights (action rows)
    b1_ref  : [1,  H]   f32
    w2_ref  : [H,  H]   bf16
    b2_ref  : [1,  H]   f32
    w3t_ref : [Ap, H]   bf16  fused, transposed Q heads (rows >= num_agents are 0)
    b3t_ref : [Ap, 1]   f32
    ot_ref  : [Ap, TB]  f32   transposed Q output (lane axis = batch -> lane-dense)
    """
    s = s_ref[...].astype(jnp.bfloat16)
    a = a_ref[...].astype(jnp.bfloat16)

    # Layer 1 (split-K == concat([state, action]) @ W1), f32 accumulate.
    h1 = jnp.dot(s, w1s_ref[...], preferred_element_type=jnp.float32)
    h1 = h1 + jnp.dot(a, w1a_ref[...], preferred_element_type=jnp.float32)
    h1 = jnp.maximum(h1 + b1_ref[...], 0.0)

    # Layer 2.
    h2 = jnp.dot(h1.astype(jnp.bfloat16), w2_ref[...],
                 preferred_element_type=jnp.float32)
    h2 = jnp.maximum(h2 + b2_ref[...], 0.0)

    # Fused Q heads, transposed: [Ap, H] x [TB, H]^T -> [Ap, TB].
    qt = jax.lax.dot_general(
        w3t_ref[...], h2.astype(jnp.bfloat16),
        dimension_numbers=(((1,), (1,)), ((), ())),
        preferred_element_type=jnp.float32)
    ot_ref[...] = qt + b3t_ref[...]


@functools.partial(jax.jit, static_argnames=("num_agents", "tb"))
def shared_critic_forward(global_state, global_action, params, *,
                          num_agents, tb=512):
    """global_state [B,S] f32, global_action [B,A] f32 -> Q [B, num_agents] f32."""
    w1s, w1a, b1 = params["w1s"], params["w1a"], params["b1"]
    w2, b2 = params["w2"], params["b2"]
    w3t, b3t = params["w3t"], params["b3t"]

    assert tb % 128 == 0, "tb must be a multiple of 128 (lane-dense output tile)"

    B, S = global_state.shape
    A = global_action.shape[1]
    a_pad = w3t.shape[0]

    # Batch tile: single tile (rounded to 8 sublanes) for small B, otherwise
    # tb-sized (128-multiple) tiles so the transposed output stays lane-dense.
    b8 = _round_up(B, 8)
    tb_eff = b8 if b8 <= tb else tb
    b_pad = _round_up(B, tb_eff)

    s = jnp.pad(global_state, ((0, b_pad - B), (0, 0)))
    a = jnp.pad(global_action, ((0, b_pad - B), (0, 0)))

    grid = (b_pad // tb_eff,)
    resident = lambda arr: pl.BlockSpec(arr.shape, lambda i: (0,) * arr.ndim)

    qt = pl.pallas_call(
        shared_critic_kernel,
        out_shape=jax.ShapeDtypeStruct((a_pad, b_pad), jnp.float32),
        grid=grid,
        in_specs=[
            pl.BlockSpec((tb_eff, S), lambda i: (i, 0)),    # state: streamed
            pl.BlockSpec((tb_eff, A), lambda i: (i, 0)),    # action: streamed
            resident(w1s), resident(w1a), resident(b1),     # weights: VMEM-resident
            resident(w2), resident(b2),
            resident(w3t), resident(b3t),
        ],
        out_specs=pl.BlockSpec((a_pad, tb_eff), lambda i: (0, i)),
        compiler_params=pltpu.CompilerParams(
            dimension_semantics=("parallel",)),
    )(s, a, w1s, w1a, b1, w2, b2, w3t, b3t)

    return qt[:num_agents, :B].T


def init_shared_critic_params(key, global_state_dim, global_action_dim,
                              hidden_dim=128, num_agents=1):
    """nn.Linear-style init; kernel params are split/pre-transposed/bf16-cast.

    Returns (kernel_params, raw_f32_params) — the latter for pure-JAX reference.
    """
    ks = jax.random.split(key, 6)
    in_dim = global_state_dim + global_action_dim

    def linear(kw, kb, fan_in, fan_out):
        bound = 1.0 / jnp.sqrt(jnp.float32(fan_in))
        w = jax.random.uniform(kw, (fan_in, fan_out), jnp.float32, -bound, bound)
        b = jax.random.uniform(kb, (1, fan_out), jnp.float32, -bound, bound)
        return w, b

    w1, b1 = linear(ks[0], ks[1], in_dim, hidden_dim)
    w2, b2 = linear(ks[2], ks[3], hidden_dim, hidden_dim)
    # All Q heads fused into a single [hidden, num_agents] matmul.
    w3, b3 = linear(ks[4], ks[5], hidden_dim, num_agents)

    raw = {"w1": w1, "b1": b1, "w2": w2, "b2": b2, "w3": w3, "b3": b3}

    a_pad = _round_up(num_agents, 8)
    kernel_params = {
        "w1s": w1[:global_state_dim].astype(jnp.bfloat16),
        "w1a": w1[global_state_dim:].astype(jnp.bfloat16),
        "b1": b1,                                                  # f32
        "w2": w2.astype(jnp.bfloat16),
        "b2": b2,                                                  # f32
        # transposed heads; zero-padded rows are sliced off in the wrapper
        "w3t": jnp.pad(w3.T, ((0, a_pad - num_agents), (0, 0))).astype(jnp.bfloat16),
        "b3t": jnp.pad(b3.T, ((0, a_pad - num_agents), (0, 0))),   # f32
    }
    return kernel_params, raw


def _reference_bf16(global_state, global_action, raw, state_dim):
    """Pure-JAX reference with matching bf16 MXU operands / f32 accumulation."""
    bf, f32 = jnp.bfloat16, jnp.float32
    w1s, w1a = raw["w1"][:state_dim], raw["w1"][state_dim:]
    h1 = jnp.maximum(
        jnp.dot(global_state.astype(bf), w1s.astype(bf), preferred_element_type=f32)
        + jnp.dot(global_action.astype(bf), w1a.astype(bf), preferred_element_type=f32)
        + raw["b1"], 0.0)
    h2 = jnp.maximum(
        jnp.dot(h1.astype(bf), raw["w2"].astype(bf), preferred_element_type=f32)
        + raw["b2"], 0.0)
    return jnp.dot(h2.astype(bf), raw["w3"].astype(bf),
                   preferred_element_type=f32) + raw["b3"]


if __name__ == "__main__":
    key = jax.random.PRNGKey(0)
    k_s, k_a, k_p, k_s2, k_a2 = jax.random.split(key, 5)

    batch = 8
    global_state_dim, global_action_dim = 16, 8
    hidden_dim, num_agents = 128, 3

    global_state = jax.random.normal(k_s, (batch, global_state_dim), jnp.float32)
    global_action = jax.random.normal(k_a, (batch, global_action_dim), jnp.float32)

    params, raw = init_shared_critic_params(
        k_p, global_state_dim, global_action_dim, hidden_dim, num_agents)

    # Small batch: single-tile path.
    q = shared_critic_forward(global_state, global_action, params,
                              num_agents=num_agents)
    q = jax.block_until_ready(q)
    assert q.shape == (batch, num_agents), q.shape

    ref = _reference_bf16(global_state, global_action, raw, global_state_dim)
    assert jnp.allclose(q, ref, atol=2e-3, rtol=2e-3), "mismatch vs bf16 reference"

    # Coarse semantic check against the full-f32 PyTorch-equivalent forward.
    xf = jnp.concatenate([global_state, global_action], axis=1)
    h1f = jnp.maximum(xf @ raw["w1"] + raw["b1"], 0.0)
    h2f = jnp.maximum(h1f @ raw["w2"] + raw["b2"], 0.0)
    reff = h2f @ raw["w3"] + raw["b3"]
    assert jnp.allclose(q, reff, atol=5e-2, rtol=5e-2), "mismatch vs f32 reference"

    # Larger, non-aligned batch: exercises batch padding + multi-step grid.
    batch2 = 260
    gs2 = jax.random.normal(k_s2, (batch2, global_state_dim), jnp.float32)
    ga2 = jax.random.normal(k_a2, (batch2, global_action_dim), jnp.float32)
    q2 = shared_critic_forward(gs2, ga2, params, num_agents=num_agents, tb=128)
    q2 = jax.block_until_ready(q2)
    assert q2.shape == (batch2, num_agents), q2.shape
    ref2 = _reference_bf16(gs2, ga2, raw, global_state_dim)
    assert jnp.allclose(q2, ref2, atol=2e-3, rtol=2e-3), "mismatch (tiled batch)"

    print("KERNEL_OK")
</pallas_src>

<mosaic_0001>
module attributes {stable_mosaic.version = 11 : i64} {
  func.func @shared_critic_kernel(%arg0: i32, %arg1: memref<8x16xf32, #tpu.memory_space<vmem>>, %arg2: memref<8x8xf32, #tpu.memory_space<vmem>>, %arg3: memref<16x128xbf16, #tpu.memory_space<vmem>>, %arg4: memref<8x128xbf16, #tpu.memory_space<vmem>>, %arg5: memref<1x128xf32, #tpu.memory_space<vmem>>, %arg6: memref<128x128xbf16, #tpu.memory_space<vmem>>, %arg7: memref<1x128xf32, #tpu.memory_space<vmem>>, %arg8: memref<8x128xbf16, #tpu.memory_space<vmem>>, %arg9: memref<8x1xf32, #tpu.memory_space<vmem>>, %arg10: memref<8x8xf32, #tpu.memory_space<vmem>>) attributes {dimension_semantics = [#tpu.dimension_semantics<parallel>], iteration_bounds = array<i64: 1>, scalar_prefetch = 0 : i64, scratch_operands = 0 : i64, tpu.core_type = #tpu.core_type<tc>, window_params = [{transform_indices = @transform_0, window_bounds = array<i64: 8, 16>}, {transform_indices = @transform_1, window_bounds = array<i64: 8, 8>}, {pipeline_mode = #tpu.pipeline_mode<synchronous>, transform_indices = @transform_2, window_bounds = array<i64: 16, 128>}, {pipeline_mode = #tpu.pipeline_mode<synchronous>, transform_indices = @transform_3, window_bounds = array<i64: 8, 128>}, {pipeline_mode = #tpu.pipeline_mode<synchronous>, transform_indices = @transform_4, window_bounds = array<i64: 1, 128>}, {pipeline_mode = #tpu.pipeline_mode<synchronous>, transform_indices = @transform_5, window_bounds = array<i64: 128, 128>}, {pipeline_mode = #tpu.pipeline_mode<synchronous>, transform_indices = @transform_6, window_bounds = array<i64: 1, 128>}, {pipeline_mode = #tpu.pipeline_mode<synchronous>, transform_indices = @transform_7, window_bounds = array<i64: 8, 128>}, {pipeline_mode = #tpu.pipeline_mode<synchronous>, transform_indices = @transform_8, window_bounds = array<i64: 8, 1>}, {transform_indices = @transform_9, window_bounds = array<i64: 8, 8>}]} {
    %c0 = arith.constant 0 : index
    %c0_0 = arith.constant 0 : index
    %0 = vector.load %arg1[%c0, %c0_0] : memref<8x16xf32, #tpu.memory_space<vmem>>, vector<8x16xf32>
    %1 = arith.truncf %0 : vector<8x16xf32> to vector<8x16xbf16>
    %c0_1 = arith.constant 0 : index
    %c0_2 = arith.constant 0 : index
    %2 = vector.load %arg2[%c0_1, %c0_2] : memref<8x8xf32, #tpu.memory_space<vmem>>, vector<8x8xf32>
    %3 = arith.truncf %2 : vector<8x8xf32> to vector<8x8xbf16>
    %c0_3 = arith.constant 0 : index
    %c0_4 = arith.constant 0 : index
    %4 = vector.load %arg3[%c0_3, %c0_4] : memref<16x128xbf16, #tpu.memory_space<vmem>>, vector<16x128xbf16>
    %cst = arith.constant dense<0.000000e+00> : vector<8x128xf32>
    %5 = tpu.matmul %1, %4, %cst {dimension_numbers = #tpu.dot_dimension_numbers<[1], [0], [0], [1], [0, 0, 1, 1], [], []>} : vector<8x16xbf16>, vector<16x128xbf16>, vector<8x128xf32> -> vector<8x128xf32>
    %c0_5 = arith.constant 0 : index
    %c0_6 = arith.constant 0 : index
    %6 = vector.load %arg4[%c0_5, %c0_6] : memref<8x128xbf16, #tpu.memory_space<vmem>>, vector<8x128xbf16>
    %cst_7 = arith.constant dense<0.000000e+00> : vector<8x128xf32>
    %7 = tpu.matmul %3, %6, %cst_7 {dimension_numbers = #tpu.dot_dimension_numbers<[1], [0], [0], [1], [0, 0, 1, 1], [], []>} : vector<8x8xbf16>, vector<8x128xbf16>, vector<8x128xf32> -> vector<8x128xf32>
    %8 = arith.addf %5, %7 : vector<8x128xf32>
    %c0_8 = arith.constant 0 : index
    %c0_9 = arith.constant 0 : index
    %9 = vector.load %arg5[%c0_8, %c0_9] : memref<1x128xf32, #tpu.memory_space<vmem>>, vector<1x128xf32>
    %10 = vector.broadcast %9 : vector<1x128xf32> to vector<8x128xf32>
    %11 = arith.addf %8, %10 : vector<8x128xf32>
    %cst_10 = arith.constant 0.000000e+00 : f32
    %12 = vector.broadcast %cst_10 : f32 to vector<8x128xf32>
    %13 = arith.maximumf %11, %12 : vector<8x128xf32>
    %14 = arith.truncf %13 : vector<8x128xf32> to vector<8x128xbf16>
    %c0_11 = arith.constant 0 : index
    %c0_12 = arith.constant 0 : index
    %15 = vector.load %arg6[%c0_11, %c0_12] : memref<128x128xbf16, #tpu.memory_space<vmem>>, vector<128x128xbf16>
    %cst_13 = arith.constant dense<0.000000e+00> : vector<8x128xf32>
    %16 = tpu.matmul %14, %15, %cst_13 {dimension_numbers = #tpu.dot_dimension_numbers<[1], [0], [0], [1], [0, 0, 1, 1], [], []>} : vector<8x128xbf16>, vector<128x128xbf16>, vector<8x128xf32> -> vector<8x128xf32>
    %c0_14 = arith.constant 0 : index
    %c0_15 = arith.constant 0 : index
    %17 = vector.load %arg7[%c0_14, %c0_15] : memref<1x128xf32, #tpu.memory_space<vmem>>, vector<1x128xf32>
    %18 = vector.broadcast %17 : vector<1x128xf32> to vector<8x128xf32>
    %19 = arith.addf %16, %18 : vector<8x128xf32>
    %cst_16 = arith.constant 0.000000e+00 : f32
    %20 = vector.broadcast %cst_16 : f32 to vector<8x128xf32>
    %21 = arith.maximumf %19, %20 : vector<8x128xf32>
    %c0_17 = arith.constant 0 : index
    %c0_18 = arith.constant 0 : index
    %22 = vector.load %arg8[%c0_17, %c0_18] : memref<8x128xbf16, #tpu.memory_space<vmem>>, vector<8x128xbf16>
    %23 = arith.truncf %21 : vector<8x128xf32> to vector<8x128xbf16>
    %cst_19 = arith.constant dense<0.000000e+00> : vector<8x8xf32>
    %24 = tpu.matmul %22, %23, %cst_19 {dimension_numbers = #tpu.dot_dimension_numbers<[1], [1], [0], [0], [0, 0, 1, 0], [], []>} : vector<8x128xbf16>, vector<8x128xbf16>, vector<8x8xf32> -> vector<8x8xf32>
    %c0_20 = arith.constant 0 : index
    %c0_21 = arith.constant 0 : index
    %25 = vector.load %arg9[%c0_20, %c0_21] : memref<8x1xf32, #tpu.memory_space<vmem>>, vector<8x1xf32>
    %26 = vector.broadcast %25 : vector<8x1xf32> to vector<8x8xf32>
    %27 = arith.addf %24, %26 : vector<8x8xf32>
    %c0_22 = arith.constant 0 : index
    %c0_23 = arith.constant 0 : index
    %28 = vector.load %arg10[%c0_22, %c0_23] : memref<8x8xf32, #tpu.memory_space<vmem>>, vector<8x8xf32>
    tpu.vector_store %arg10[%c0_22, %c0_23], %27 {strides = array<i32>} : memref<8x8xf32, #tpu.memory_space<vmem>>, vector<8x8xf32>,
    return
  }
  func.func @transform_0(%arg0: i32) -> (i32, i32) {
    %c0_i32 = arith.constant 0 : i32
    %c0_i32_0 = arith.constant 0 : i32
    return %arg0, %c0_i32 : i32, i32
  }
  func.func @transform_1(%arg0: i32) -> (i32, i32) {
    %c0_i32 = arith.constant 0 : i32
    %c0_i32_0 = arith.constant 0 : i32
    return %arg0, %c0_i32 : i32, i32
  }
  func.func @transform_2(%arg0: i32) -> (i32, i32) {
    %c0_i32 = arith.constant 0 : i32
    %c0_i32_0 = arith.constant 0 : i32
    %c0_i32_1 = arith.constant 0 : i32
    return %c0_i32, %c0_i32_0 : i32, i32
  }
  func.func @transform_3(%arg0: i32) -> (i32, i32) {
    %c0_i32 = arith.constant 0 : i32
    %c0_i32_0 = arith.constant 0 : i32
    %c0_i32_1 = arith.constant 0 : i32
    return %c0_i32, %c0_i32_0 : i32, i32
  }
  func.func @transform_4(%arg0: i32) -> (i32, i32) {
    %c0_i32 = arith.constant 0 : i32
    %c0_i32_0 = arith.constant 0 : i32
    %c0_i32_1 = arith.constant 0 : i32
    return %c0_i32, %c0_i32_0 : i32, i32
  }
  func.func @transform_5(%arg0: i32) -> (i32, i32) {
    %c0_i32 = arith.constant 0 : i32
    %c0_i32_0 = arith.constant 0 : i32
    %c0_i32_1 = arith.constant 0 : i32
    return %c0_i32, %c0_i32_0 : i32, i32
  }
  func.func @transform_6(%arg0: i32) -> (i32, i32) {
    %c0_i32 = arith.constant 0 : i32
    %c0_i32_0 = arith.constant 0 : i32
    %c0_i32_1 = arith.constant 0 : i32
    return %c0_i32, %c0_i32_0 : i32, i32
  }
  func.func @transform_7(%arg0: i32) -> (i32, i32) {
    %c0_i32 = arith.constant 0 : i32
    %c0_i32_0 = arith.constant 0 : i32
    %c0_i32_1 = arith.constant 0 : i32
    return %c0_i32, %c0_i32_0 : i32, i32
  }
  func.func @transform_8(%arg0: i32) -> (i32, i32) {
    %c0_i32 = arith.constant 0 : i32
    %c0_i32_0 = arith.constant 0 : i32
    %c0_i32_1 = arith.constant 0 : i32
    return %c0_i32, %c0_i32_0 : i32, i32
  }
  func.func @transform_9(%arg0: i32) -> (i32, i32) {
    %c0_i32 = arith.constant 0 : i32
    %c0_i32_0 = arith.constant 0 : i32
    return %c0_i32, %arg0 : i32, i32
  }
}

</mosaic_0001>

<llo_original>
// kernel: shared_critic_forward.1
$region0: #{shared_critic_forward.1}
  #allocation0 [shape = 'u32[]', space=smem, size = 0x4, offset = 0x4, fixed_abs, tag = 'smem constant byte address 0x4 - core index']
  #allocation1 [shape = 'u32[144,128]{1,0:T(1,128)}', space=vmem, size = 0x12000, scoped, tag = 'internal scratch']
  %s0 = inlined_call_operand.vmem [shape: f32[8,16], index: 0, kind: input, shape index: {}]
  %s1 = inlined_call_operand.hbm [shape: f32[8,8], index: 1, kind: input, shape index: {}]
  %s2 = inlined_call_operand.vmem [shape: bf16[16,128], index: 2, kind: input, shape index: {}]
  %s3 = inlined_call_operand.vmem [shape: bf16[8,128], index: 3, kind: input, shape index: {}]
  %s4 = inlined_call_operand.hbm [shape: f32[1,128], index: 4, kind: input, shape index: {}]
  %s5 = inlined_call_operand.hbm [shape: bf16[128,128], index: 5, kind: input, shape index: {}]
  %s6 = inlined_call_operand.hbm [shape: f32[1,128], index: 6, kind: input, shape index: {}]
  %s7 = inlined_call_operand.vmem [shape: bf16[8,128], index: 7, kind: input, shape index: {}]
  %s8 = inlined_call_operand.vmem [shape: f32[8,1], index: 8, kind: input, shape index: {}]
  %s9 = inlined_call_operand.vmem [shape: f32[8,8], index: 9, kind: output, shape index: {}]
  %s10 = sld [smem:[#allocation0]]
  $region62: #{shared_critic_forward.1} parent=0
    _
  %s12 = ssub.s32 1, %s10
  %s13 = scalar_select 0, %s12, %s10
  $region1: #{shared_critic_forward.1} parent=0
    #allocation2 [shape = 'u8[4096]{0}', space=vmem, size = 0x1000, scoped, tag = 'input window, operand 1, single buffered']
    #allocation3 [shape = 's32[1]{0}', space=sflag, size = 0x4, scoped, tag = 'scoped memory for shared_critic_forward.1']
    #allocation4 [shape = 'u8[512]{0}', space=vmem, size = 0x400, scoped, tag = 'input window, operand 4, single buffered']
    #allocation5 [shape = 's32[1]{0}', space=sflag, size = 0x4, scoped, tag = 'scoped memory for shared_critic_forward.1']
    #allocation6 [shape = 'u8[32768]{0}', space=vmem, size = 0x8000, scoped, tag = 'input window, operand 5, single buffered']
    #allocation7 [shape = 'u8[512]{0}', space=vmem, size = 0x400, scoped, tag = 'input window, operand 6, single buffered']
    #allocation8 [shape = 's32[1]{0}', space=sflag, size = 0x4, scoped, tag = 'scoped memory for shared_critic_forward.1']
    %14 = vsyncpa [#allocation3], 0
    %15 = vsyncpa [#allocation5], 0
    %16 = vsyncpa [#allocation8], 0
    // Predicated region
    $region2: #{shared_critic_forward.1} parent=1 // pred_check
      _
    $region3: #{shared_critic_forward.1} parent=1 // pred_check_branch
      %18 = sbr.rel (0) target = $region5
    $region4: #{shared_critic_forward.1} parent=1 // pred_region
      _
    $region5: #{shared_critic_forward.1} parent=1 // pred_fallthru
      _
    // Predicated region
    $region6: #{shared_critic_forward.1} parent=1 // pred_check
      _
    $region7: #{shared_critic_forward.1} parent=1 // pred_check_branch
      %20 = sbr.rel (0) target = $region9
    $region8: #{shared_critic_forward.1} parent=1 // pred_region
      %s22 = ssub.s32 128, 128
      %23 = vsyncadd [#allocation3], %s22
      %s25 = sshll.u32 [#allocation2], 4
      %s26 = int_to_ptr.vmem [resolvable:$true] %s25
      %28 = dma.hbm_to_vmem [thread:$0]  %s1, 128, %s26, [#allocation3]
    $region9: #{shared_critic_forward.1} parent=1 // pred_fallthru
      _
    // Predicated region
    $region10: #{shared_critic_forward.1} parent=1 // pred_check
      _
    $region11: #{shared_critic_forward.1} parent=1 // pred_check_branch
      %30 = sbr.rel (0) target = $region13
    $region12: #{shared_critic_forward.1} parent=1 // pred_region
      _
    $region13: #{shared_critic_forward.1} parent=1 // pred_fallthru
      _
    // Predicated region
    $region14: #{shared_critic_forward.1} parent=1 // pred_check
      _
    $region15: #{shared_critic_forward.1} parent=1 // pred_check_branch
      %32 = sbr.rel (0) target = $region17
    $region16: #{shared_critic_forward.1} parent=1 // pred_region
      _
    $region17: #{shared_critic_forward.1} parent=1 // pred_fallthru
      _
    // Predicated region
    $region18: #{shared_critic_forward.1} parent=1 // pred_check
      _
    $region19: #{shared_critic_forward.1} parent=1 // pred_check_branch
      %34 = sbr.rel (0) target = $region21
    $region20: #{shared_critic_forward.1} parent=1 // pred_region
      %s36 = ssub.s32 16, 16
      %37 = vsyncadd [#allocation5], %s36
      %s39 = sshll.u32 [#allocation4], 4
      %s40 = int_to_ptr.vmem [resolvable:$true] %s39
      %42 = dma.hbm_to_vmem [thread:$0]  %s4, 16, %s40, [#allocation5]
    $region21: #{shared_critic_forward.1} parent=1 // pred_fallthru
      _
    // Predicated region
    $region22: #{shared_critic_forward.1} parent=1 // pred_check
      _
    $region23: #{shared_critic_forward.1} parent=1 // pred_check_branch
      %44 = sbr.rel (0) target = $region25
    $region24: #{shared_critic_forward.1} parent=1 // pred_region
      %s46 = ssub.s32 1024, 1024
      %47 = vsyncadd [#allocation5], %s46
      %s48 = sshll.u32 [#allocation6], 4
      %s49 = int_to_ptr.vmem [resolvable:$true] %s48
      %54 = dma.hbm_to_vmem [thread:$0]  %s5, 1024, %s49, [#allocation5], 64, 64, 4
    $region25: #{shared_critic_forward.1} parent=1 // pred_fallthru
      _
    // Predicated region
    $region26: #{shared_critic_forward.1} parent=1 // pred_check
      _
    $region27: #{shared_critic_forward.1} parent=1 // pred_check_branch
      %56 = sbr.rel (0) target = $region29
    $region28: #{shared_critic_forward.1} parent=1 // pred_region
      %s58 = ssub.s32 16, 16
      %59 = vsyncadd [#allocation8], %s58
      %s61 = sshll.u32 [#allocation7], 4
      %s62 = int_to_ptr.vmem [resolvable:$true] %s61
      %64 = dma.hbm_to_vmem [thread:$0]  %s6, 16, %s62, [#allocation8]
    $region29: #{shared_critic_forward.1} parent=1 // pred_fallthru
      _
    // Predicated region
    $region30: #{shared_critic_forward.1} parent=1 // pred_check
      _
    $region31: #{shared_critic_forward.1} parent=1 // pred_check_branch
      %66 = sbr.rel (0) target = $region33
    $region32: #{shared_critic_forward.1} parent=1 // pred_region
      _
    $region33: #{shared_critic_forward.1} parent=1 // pred_fallthru
      _
    // Predicated region
    $region34: #{shared_critic_forward.1} parent=1 // pred_check
      _
    $region35: #{shared_critic_forward.1} parent=1 // pred_check_branch
      %68 = sbr.rel (0) target = $region37
    $region36: #{shared_critic_forward.1} parent=1 // pred_region
      _
    $region37: #{shared_critic_forward.1} parent=1 // pred_fallthru
      _
    // Predicated region
    $region38: #{shared_critic_forward.1} parent=1 // pred_check
      _
    $region39: #{shared_critic_forward.1} parent=1 // pred_check_branch
      %70 = sbr.rel (0) target = $region41
    $region40: #{shared_critic_forward.1} parent=1 // pred_region
      %71 = dma.done [#allocation3], 128
    $region41: #{shared_critic_forward.1} parent=1 // pred_fallthru
      _
    // Predicated region
    $region42: #{shared_critic_forward.1} parent=1 // pred_check
      _
    $region43: #{shared_critic_forward.1} parent=1 // pred_check_branch
      %73 = sbr.rel (0) target = $region45
    $region44: #{shared_critic_forward.1} parent=1 // pred_region
      %74 = dma.done [#allocation5], 16
    $region45: #{shared_critic_forward.1} parent=1 // pred_fallthru
      _
    // Predicated region
    $region46: #{shared_critic_forward.1} parent=1 // pred_check
      _
    $region47: #{shared_critic_forward.1} parent=1 // pred_check_branch
      %76 = sbr.rel (0) target = $region49
    $region48: #{shared_critic_forward.1} parent=1 // pred_region
      %77 = dma.done [#allocation5], 1024
    $region49: #{shared_critic_forward.1} parent=1 // pred_fallthru
      _
    // Predicated region
    $region50: #{shared_critic_forward.1} parent=1 // pred_check
      _
    $region51: #{shared_critic_forward.1} parent=1 // pred_check_branch
      %79 = sbr.rel (0) target = $region53
    $region52: #{shared_critic_forward.1} parent=1 // pred_region
      %80 = dma.done [#allocation8], 16
    $region53: #{shared_critic_forward.1} parent=1 // pred_fallthru
      _
    %v82 = vld [vmem:[%s0] sm:$0xff]
    %v83 = vpack.c.bf16 %v82, %v82
    %v84 = vld [vmem:[#allocation2] sm:$0xff]
    %v85 = vpack.c.bf16 %v84, %v84
    %v86 = vld [vmem:[%s2] sm:$0xf]
    %v87 = vld [vmem:[%s2 + $0x4] sm:$0xf]
    %v88 = vld [vmem:[%s3] sm:$0xf]
    %vm89 = vcmask 64512
    %v91 = vsel %vm89, %v85, 0
    %vm93 = vcmask 1043456
    %v95 = vsel %vm93, %v88, 0
    %97 = vmatprep.subr.bf16.mxu0 0
    %98 = vmatpush1.bf16.msra.mxu0 %v95
    %99 = vmatprep.subr.bf16.mxu0 0
    %100 = vmatpush1.bf16.msra.mxu0 0
    %101 = vmatprep.subr.bf16.mxu0 0
    %102 = vmatpush1.bf16.msra.mxu0 0
    %103 = vmatprep.subr.bf16.mxu0 0
    %104 = vmatpush1.bf16.msra.mxu0 0
    %105 = vmatprep.subr.bf16.mxu0 0
    %106 = vmatpush1.bf16.msra.mxu0 0
    %107 = vmatprep.subr.bf16.mxu0 0
    %108 = vmatpush1.bf16.msra.mxu0 0
    %109 = vmatprep.subr.bf16.mxu0 0
    %110 = vmatpush1.bf16.msra.mxu0 0
    %111 = vmatprep.subr.bf16.mxu0 0
    %112 = vmatpush1.bf16.msra.mxu0 0
    %113 = vmatprep.subr.bf16.mxu0 0
    %114 = vmatpush1.bf16.msra.mxu0 0
    %115 = vmatprep.subr.bf16.mxu0 0
    %116 = vmatpush1.bf16.msra.mxu0 0
    %117 = vmatprep.subr.bf16.mxu0 0
    %118 = vmatpush1.bf16.msra.mxu0 0
    %119 = vmatprep.subr.bf16.mxu0 0
    %120 = vmatpush1.bf16.msra.mxu0 0
    %121 = vmatprep.subr.bf16.mxu0 0
    %122 = vmatpush1.bf16.msra.mxu0 0
    %123 = vmatprep.subr.bf16.mxu0 0
    %124 = vmatpush1.bf16.msra.mxu0 0
    %125 = vmatprep.subr.bf16.mxu0 0
    %126 = vmatpush1.bf16.msra.mxu0 0
    %127 = vmatprep.subr.bf16.mxu0 0
    %128 = vmatpush1.bf16.msra.mxu0 0
    %129 = vmatprep.mubr.bf16.mxu0 0
    %130 = vmatmul.mubr.bf16.gmra.mrb[0].mxu0 %v91
    %v131 = vpop.f32.mrb[0].mxu0
    %v132 = vadd.f32 0.0, %v131
    %v133 = vpop.f32.mrb[0].mxu0
    %v134 = vpop.f32.mrb[0].mxu0
    %v135 = vpop.f32.mrb[0].mxu0
    %136 = vdwg.mxu0
    %v139 = vunpack.c.l.b16 %v86
    %v140 = vunpack.c.l.b16 %v87
    %v141 = vpack.c.b16 %v140, %v139
    %vm143 = vcmask 130048
    %v145 = vsel %vm143, %v83, 0
    %147 = vmatprep.subr.bf16.mxu0 0
    %148 = vmatpush1.bf16.msra.mxu0 %v141
    %149 = vmatprep.subr.bf16.mxu0 0
    %150 = vmatpush1.bf16.msra.mxu0 0
    %151 = vmatprep.subr.bf16.mxu0 0
    %152 = vmatpush1.bf16.msra.mxu0 0
    %153 = vmatprep.subr.bf16.mxu0 0
    %154 = vmatpush1.bf16.msra.mxu0 0
    %155 = vmatprep.subr.bf16.mxu0 0
    %156 = vmatpush1.bf16.msra.mxu0 0
    %157 = vmatprep.subr.bf16.mxu0 0
    %158 = vmatpush1.bf16.msra.mxu0 0
    %159 = vmatprep.subr.bf16.mxu0 0
    %160 = vmatpush1.bf16.msra.mxu0 0
    %161 = vmatprep.subr.bf16.mxu0 0
    %162 = vmatpush1.bf16.msra.mxu0 0
    %163 = vmatprep.subr.bf16.mxu0 0
    %164 = vmatpush1.bf16.msra.mxu0 0
    %165 = vmatprep.subr.bf16.mxu0 0
    %166 = vmatpush1.bf16.msra.mxu0 0
    %167 = vmatprep.subr.bf16.mxu0 0
    %168 = vmatpush1.bf16.msra.mxu0 0
    %169 = vmatprep.subr.bf16.mxu0 0
    %170 = vmatpush1.bf16.msra.mxu0 0
    %171 = vmatprep.subr.bf16.mxu0 0
    %172 = vmatpush1.bf16.msra.mxu0 0
    %173 = vmatprep.subr.bf16.mxu0 0
    %174 = vmatpush1.bf16.msra.mxu0 0
    %175 = vmatprep.subr.bf16.mxu0 0
    %176 = vmatpush1.bf16.msra.mxu0 0
    %177 = vmatprep.subr.bf16.mxu0 0
    %178 = vmatpush1.bf16.msra.mxu0 0
    %179 = vmatprep.mubr.bf16.mxu0 0
    %180 = vmatmul.mubr.bf16.gmra.mrb[0].mxu0 %v145
    %v181 = vpop.f32.mrb[0].mxu0
    %v182 = vadd.f32 %v132, %v181
    %v183 = vpop.f32.mrb[0].mxu0
    %v184 = vpop.f32.mrb[0].mxu0
    %v185 = vpop.f32.mrb[0].mxu0
    %186 = vdwg.mxu0
    %v187 = vld [vmem:[#allocation4] sm:$0x1]
    %v189 = vlaneseq
    %v190 = vshrl.u32 %v189, 7
    %v191 = vsub.s32 0, %v190
    %v192 = vrot.slane %v187, %v191
    %v194 = vadd.f32 %v182, %v192
    %v195 = vmax.f32 %v194, 0.0
    %v196 = vpack.c.bf16 %v195, %v195
    %v197 = vld [vmem:[#allocation6] sm:$0xf]
    %v198 = vld [vmem:[#allocation6 + $0x4] sm:$0xf]
    %v199 = vld [vmem:[#allocation6 + $0x8] sm:$0xf]
    %v200 = vld [vmem:[#allocation6 + $0xc] sm:$0xf]
    %v201 = vld [vmem:[#allocation6 + $0x10] sm:$0xf]
    %v202 = vld [vmem:[#allocation6 + $0x14] sm:$0xf]
    %v203 = vld [vmem:[#allocation6 + $0x18] sm:$0xf]
    %v204 = vld [vmem:[#allocation6 + $0x1c] sm:$0xf]
    %v205 = vld [vmem:[#allocation6 + $0x20] sm:$0xf]
    %v206 = vld [vmem:[#allocation6 + $0x24] sm:$0xf]
    %v207 = vld [vmem:[#allocation6 + $0x28] sm:$0xf]
    %v208 = vld [vmem:[#allocation6 + $0x2c] sm:$0xf]
    %v209 = vld [vmem:[#allocation6 + $0x30] sm:$0xf]
    %v210 = vld [vmem:[#allocation6 + $0x34] sm:$0xf]
    %v211 = vld [vmem:[#allocation6 + $0x38] sm:$0xf]
    %v212 = vld [vmem:[#allocation6 + $0x3c] sm:$0xf]
    %v213 = vld [vmem:[#allocation7] sm:$0x1]
    %v215 = vlaneseq
    %v216 = vshrl.u32 %v215, 7
    %v217 = vsub.s32 0, %v216
    %v218 = vrot.slane %v213, %v217
    %v236 = vunpack.c.l.b16 %v197
    %v237 = vunpack.c.l.b16 %v198
    %v238 = vunpack.c.l.b16 %v199
    %v239 = vunpack.c.l.b16 %v200
    %v240 = vunpack.c.l.b16 %v201
    %v241 = vunpack.c.l.b16 %v202
    %v242 = vunpack.c.l.b16 %v203
    %v243 = vunpack.c.l.b16 %v204
    %v244 = vunpack.c.l.b16 %v205
    %v245 = vunpack.c.l.b16 %v206
    %v246 = vunpack.c.l.b16 %v207
    %v247 = vunpack.c.l.b16 %v208
    %v248 = vunpack.c.l.b16 %v209
    %v249 = vunpack.c.l.b16 %v210
    %v250 = vunpack.c.l.b16 %v211
    %v251 = vunpack.c.l.b16 %v212
    %v252 = vpack.c.b16 %v237, %v236
    %v253 = vpack.c.b16 %v239, %v238
    %v254 = vpack.c.b16 %v241, %v240
    %v255 = vpack.c.b16 %v243, %v242
    %v256 = vpack.c.b16 %v245, %v244
    %v257 = vpack.c.b16 %v247, %v246
    %v258 = vpack.c.b16 %v249, %v248
    %v259 = vpack.c.b16 %v251, %v250
    %268 = vmatprep.subr.bf16.mxu0 0
    %269 = vmatpush1.bf16.msra.mxu0 %v252
    %270 = vmatprep.subr.bf16.mxu0 0
    %271 = vmatpush1.bf16.msra.mxu0 %v253
    %272 = vmatprep.subr.bf16.mxu0 0
    %273 = vmatpush1.bf16.msra.mxu0 %v254
    %274 = vmatprep.subr.bf16.mxu0 0
    %275 = vmatpush1.bf16.msra.mxu0 %v255
    %276 = vmatprep.subr.bf16.mxu0 0
    %277 = vmatpush1.bf16.msra.mxu0 %v256
    %278 = vmatprep.subr.bf16.mxu0 0
    %279 = vmatpush1.bf16.msra.mxu0 %v257
    %280 = vmatprep.subr.bf16.mxu0 0
    %281 = vmatpush1.bf16.msra.mxu0 %v258
    %282 = vmatprep.subr.bf16.mxu0 0
    %283 = vmatpush1.bf16.msra.mxu0 %v259
    %284 = vmatprep.subr.bf16.mxu0 0
    %285 = vmatpush1.bf16.msra.mxu0 0
    %286 = vmatprep.subr.bf16.mxu0 0
    %287 = vmatpush1.bf16.msra.mxu0 0
    %288 = vmatprep.subr.bf16.mxu0 0
    %289 = vmatpush1.bf16.msra.mxu0 0
    %290 = vmatprep.subr.bf16.mxu0 0
    %291 = vmatpush1.bf16.msra.mxu0 0
    %292 = vmatprep.subr.bf16.mxu0 0
    %293 = vmatpush1.bf16.msra.mxu0 0
    %294 = vmatprep.subr.bf16.mxu0 0
    %295 = vmatpush1.bf16.msra.mxu0 0
    %296 = vmatprep.subr.bf16.mxu0 0
    %297 = vmatpush1.bf16.msra.mxu0 0
    %298 = vmatprep.subr.bf16.mxu0 0
    %299 = vmatpush1.bf16.msra.mxu0 0
    %300 = vmatprep.mubr.bf16.mxu0 0
    %301 = vmatmul.mubr.bf16.gmra.mrb[0].mxu0 %v196
    %v302 = vpop.f32.mrb[0].mxu0
    %v303 = vadd.f32 %v218, %v302
    %v304 = vpop.f32.mrb[0].mxu0
    %v305 = vpop.f32.mrb[0].mxu0
    %v306 = vpop.f32.mrb[0].mxu0
    %307 = vdwg.mxu0
    %v308 = vmax.f32 %v303, 0.0
    %v309 = vld [vmem:[%s7] sm:$0xf]
    %v310 = vpack.c.bf16 %v308, %v308
    %v311 = vld [vmem:[%s8] sm:$0xff]
    %313 = vset.pattern.permute.xlu0 0
    %314 = vperm.xlu0 %313, %v311
    %v315 = vpop.permute.xlu0 %314
    %317 = vmatprep.subr.bf16.mxu0 0
    %318 = vmatpush1.bf16.xpose.msra.mxu0 %v310
    %319 = vmatprep.subr.bf16.mxu0 0
    %320 = vmatpush1.bf16.xpose.msra.mxu0 0
    %321 = vmatprep.subr.bf16.mxu0 0
    %322 = vmatpush1.bf16.xpose.msra.mxu0 0
    %323 = vmatprep.subr.bf16.mxu0 0
    %324 = vmatpush1.bf16.xpose.msra.mxu0 0
    %325 = vmatprep.subr.bf16.mxu0 0
    %326 = vmatpush1.bf16.xpose.msra.mxu0 0
    %327 = vmatprep.subr.bf16.mxu0 0
    %328 = vmatpush1.bf16.xpose.msra.mxu0 0
    %329 = vmatprep.subr.bf16.mxu0 0
    %330 = vmatpush1.bf16.xpose.msra.mxu0 0
    %331 = vmatprep.subr.bf16.mxu0 0
    %332 = vmatpush1.bf16.xpose.msra.mxu0 0
    %333 = vmatprep.subr.bf16.mxu0 0
    %334 = vmatpush1.bf16.xpose.msra.mxu0 0
    %335 = vmatprep.subr.bf16.mxu0 0
    %336 = vmatpush1.bf16.xpose.msra.mxu0 0
    %337 = vmatprep.subr.bf16.mxu0 0
    %338 = vmatpush1.bf16.xpose.msra.mxu0 0
    %339 = vmatprep.subr.bf16.mxu0 0
    %340 = vmatpush1.bf16.xpose.msra.mxu0 0
    %341 = vmatprep.subr.bf16.mxu0 0
    %342 = vmatpush1.bf16.xpose.msra.mxu0 0
    %343 = vmatprep.subr.bf16.mxu0 0
    %344 = vmatpush1.bf16.xpose.msra.mxu0 0
    %345 = vmatprep.subr.bf16.mxu0 0
    %346 = vmatpush1.bf16.xpose.msra.mxu0 0
    %347 = vmatprep.subr.bf16.mxu0 0
    %348 = vmatpush1.bf16.xpose.msra.mxu0 0
    %349 = vmatprep.mubr.bf16.mxu0 0
    %350 = vmatmul.mubr.bf16.gmra.mrb[0].mxu0 %v309
    %v351 = vpop.f32.mrb[0].mxu0
    %v352 = vadd.f32 %v315, %v351
    %v353 = vpop.f32.mrb[0].mxu0
    %v354 = vpop.f32.mrb[0].mxu0
    %v355 = vpop.f32.mrb[0].mxu0
    %356 = vdwg.mxu0
    %357 = vst.msk [vmem:[%s9] sm:$0xff] %vm89, %v352
    // Predicated region
    $region54: #{shared_critic_forward.1} parent=1 // pred_check
      _
    $region55: #{shared_critic_forward.1} parent=1 // pred_check_branch
      %359 = sbr.rel (0) target = $region57
    $region56: #{shared_critic_forward.1} parent=1 // pred_region
      _
    $region57: #{shared_critic_forward.1} parent=1 // pred_fallthru
      _
    // Predicated region
    $region58: #{shared_critic_forward.1} parent=1 // pred_check
      _
    $region59: #{shared_critic_forward.1} parent=1 // pred_check_branch
      %361 = sbr.rel (0) target = $region61
    $region60: #{shared_critic_forward.1} parent=1 // pred_region
      _
    $region61: #{shared_critic_forward.1} parent=1 // pred_fallthru
      _
    %362 = vsyncpa [#allocation3], 1
    %363 = vsyncpa [#allocation5], 1
    %364 = vsyncpa [#allocation8], 1

</llo_original>
